<compile_context>
chip_gen: v6e
topology: v6e:2x2x1
jax: 0.10.0
libtpu: 0.0.40
codegen_flags: <defaults>
</compile_context>

<pallas_src>
import jax
import jax.numpy as jnp
from jax.experimental import pallas as pl
from jax.experimental.pallas import tpu as pltpu


def _multires_conv_kernel(branch_ref, p_ref, w_ref, b_ref, o_ref):
    """One grid step (one TM-wide column tile of one branch).

    branch_ref: SMEM step->branch table (consumed by the index_maps).
    p_ref: (Kmax, TM)  im2col columns (lane axis = output position, dense)
    w_ref: (O, Kmax)   this branch's weights, zero-padded past the real K
    b_ref: (O, 1)      this branch's bias
    o_ref: (O, TM)     lane-dense output tile
    """
    del branch_ref  # only used by the index_maps
    acc = jnp.dot(w_ref[...], p_ref[...],
                  preferred_element_type=jnp.float32,
                  precision=jax.lax.Precision.HIGHEST)   # exact-f32 MXU passes
    o_ref[...] = (acc + b_ref[...]).astype(o_ref.dtype)


def _im2col_cols(x, k, kmax, stride, padding, l_out, m_pad):
    """x: (N, L) -> cols (Kmax, M_pad), cols[kk, n*L_out + t] = x_pad[n, t*stride + kk].

    Built from K strided slices (lowers to strided copies, not a gather +
    transpose of the K-x inflated array).
    """
    n = x.shape[0]
    x_p = jnp.pad(x, ((0, 0), (padding, padding)))
    last = (l_out - 1) * stride
    cols = jnp.stack(
        [x_p[:, kk:kk + last + 1:stride] for kk in range(k)], axis=0)  # (K, N, L_out)
    cols = cols.reshape(k, n * l_out)
    return jnp.pad(cols, ((0, kmax - k), (0, m_pad - n * l_out)))


def multires_patching(xs, weights, biases, strides, padding, *, tm_cap=1024):
    """xs: [(N,L0),(N,L1)]; weights: [(O,1,K_i)] (torch layout); biases: [(O,)].

    Returns channels-last (N, L_out0 + L_out1, O), matching
    cat([conv1(x0).transpose(1,2), conv2(x1).transpose(1,2)], dim=1).
    """
    n = xs[0].shape[0]
    o_feat = weights[0].shape[0]
    ks = [int(w.shape[-1]) for w in weights]
    kmax = max(pl.cdiv(max(ks), 8) * 8, 8)          # sublane-aligned contraction depth

    tm_cap = max(128, (int(tm_cap) // 128) * 128)   # keep lane tile 128-aligned

    l_outs = [(xs[i].shape[1] + 2 * padding[i] - ks[i]) // strides[i] + 1
              for i in range(2)]
    ms = [n * lo for lo in l_outs]                  # real columns per branch
    # Lane-dense column tile: whole 128-padded M in one block when small,
    # otherwise 1024-wide tiles (per-step VMEM is tiny; overhead-bound regime).
    tm = min(tm_cap, pl.cdiv(max(ms), 128) * 128)
    m_pads = [pl.cdiv(m, tm) * tm for m in ms]      # per-branch padding only
    tiles = [mp // tm for mp in m_pads]
    total_tiles = tiles[0] + tiles[1]

    # Per-branch im2col columns, concatenated on the lane axis: (Kmax, M0p+M1p).
    cols = jnp.concatenate([
        _im2col_cols(xs[i], ks[i], kmax, strides[i], padding[i], l_outs[i], m_pads[i])
        for i in range(2)
    ], axis=1)

    w_all = jnp.stack([
        jnp.pad(weights[i][:, 0, :].astype(jnp.float32), ((0, 0), (0, kmax - ks[i])))
        for i in range(2)
    ])                                                               # (2, O, Kmax)
    b_all = jnp.stack([b.reshape(o_feat, 1).astype(jnp.float32)
                       for b in biases])                             # (2, O, 1)

    # Scalar-prefetched step -> branch table (drives the weight/bias index_maps).
    branch_tbl = jnp.array([0] * tiles[0] + [1] * tiles[1], dtype=jnp.int32)

    m_total = m_pads[0] + m_pads[1]
    cost = pl.CostEstimate(
        flops=2 * m_total * kmax * o_feat,
        transcendentals=0,
        bytes_accessed=4 * (cols.size + w_all.size + b_all.size + o_feat * m_total),
    )

    out = pl.pallas_call(
        _multires_conv_kernel,
        out_shape=jax.ShapeDtypeStruct((o_feat, m_total), jnp.float32),
        grid_spec=pltpu.PrefetchScalarGridSpec(
            num_scalar_prefetch=1,
            grid=(total_tiles,),
            in_specs=[
                pl.BlockSpec((kmax, tm), lambda i, br: (0, i)),
                pl.BlockSpec((None, o_feat, kmax), lambda i, br: (br[i], 0, 0)),
                pl.BlockSpec((None, o_feat, 1), lambda i, br: (br[i], 0, 0)),
            ],
            out_specs=pl.BlockSpec((o_feat, tm), lambda i, br: (0, i)),
        ),
        compiler_params=pltpu.CompilerParams(
            dimension_semantics=("parallel",)),
        cost_estimate=cost,
    )(branch_tbl, cols, w_all, b_all)

    # Glue: (O, M) slabs -> (N, L_out, O) per branch, concat on the seq axis.
    ys = []
    off = 0
    for i in range(2):
        ys.append(out[:, off:off + ms[i]].T.reshape(n, l_outs[i], o_feat))
        off += m_pads[i]
    return jnp.concatenate(ys, axis=1)


class MultiResolutionPatchingPallas:
    """Pallas port of MultiResolutionPatching (two Conv1d branches, concat on seq)."""

    def __init__(self, in_features, out_features, kernel_sizes, strides, padding, key):
        # forward()'s unsqueeze(-1).transpose(1, 2) on an (N, L) series implies in_channels == 1
        assert in_features == 1, "forward() semantics imply Conv1d in_channels == 1"
        k1, k2, k3, k4 = jax.random.split(key, 4)

        def conv_params(kw, kb, ksz):
            # Deterministic synthetic init matching PyTorch Conv1d default bounds:
            # weight, bias ~ U(-1/sqrt(fan_in), 1/sqrt(fan_in)), fan_in = in_ch * K
            fan_in = in_features * ksz
            bound = 1.0 / (fan_in ** 0.5)
            w = jax.random.uniform(kw, (out_features, in_features, ksz),
                                   minval=-bound, maxval=bound, dtype=jnp.float32)
            b = jax.random.uniform(kb, (out_features,),
                                   minval=-bound, maxval=bound, dtype=jnp.float32)
            return w, b

        self.w1, self.b1 = conv_params(k1, k2, kernel_sizes[0])
        self.w2, self.b2 = conv_params(k3, k4, kernel_sizes[1])
        self.strides = list(strides)
        self.padding = list(padding)

    def __call__(self, x):
        # x: [ (N, L0), (N, L1) ]  ->  (N, L_out0 + L_out1, out_features)
        return multires_patching(x, [self.w1, self.w2], [self.b1, self.b2],
                                 self.strides, self.padding)


def _ref_conv_branch(x, w, b, stride, padding):
    """Pure-JAX reference: Conv1d (NCW) then transpose(1, 2), exact f32."""
    xin = x[:, None, :]  # (N, 1, L)
    y = jax.lax.conv_general_dilated(
        xin, w, window_strides=(stride,), padding=[(padding, padding)],
        dimension_numbers=("NCH", "OIH", "NCH"),
        precision=jax.lax.Precision.HIGHEST)
    y = y + b[None, :, None]
    return jnp.transpose(y, (0, 2, 1))  # (N, L_out, O)


if __name__ == "__main__":
    key = jax.random.PRNGKey(0)
    kx0, kx1, kparams = jax.random.split(key, 3)

    N = 2
    in_features = 1
    out_features = 32
    kernel_sizes = [4, 8]
    strides = [2, 4]
    padding = [1, 2]
    L0, L1 = 16, 16

    x0 = jax.random.normal(kx0, (N, L0), dtype=jnp.float32)
    x1 = jax.random.normal(kx1, (N, L1), dtype=jnp.float32)

    mod = MultiResolutionPatchingPallas(in_features, out_features,
                                        kernel_sizes, strides, padding, kparams)
    out = jax.block_until_ready(mod([x0, x1]))

    # Cross-check against an exact-f32 pure-JAX conv reference.
    ref = jnp.concatenate([
        _ref_conv_branch(x0, mod.w1, mod.b1, strides[0], padding[0]),
        _ref_conv_branch(x1, mod.w2, mod.b2, strides[1], padding[1]),
    ], axis=1)

    l_out0 = (L0 + 2 * padding[0] - kernel_sizes[0]) // strides[0] + 1
    l_out1 = (L1 + 2 * padding[1] - kernel_sizes[1]) // strides[1] + 1
    assert out.shape == (N, l_out0 + l_out1, out_features), out.shape
    assert jnp.allclose(out, ref, atol=1e-5, rtol=1e-5), float(jnp.max(jnp.abs(out - ref)))
    print("KERNEL_OK")
</pallas_src>

<mosaic_0001>
module attributes {stable_mosaic.version = 11 : i64} {
  func.func @_multires_conv_kernel(%arg0: i32, %arg1: memref<2xi32, #tpu.memory_space<smem>>, %arg2: memref<8x128xf32, #tpu.memory_space<vmem>>, %arg3: memref<1x32x8xf32, #tpu.memory_space<vmem>>, %arg4: memref<1x32x1xf32, #tpu.memory_space<vmem>>, %arg5: memref<32x128xf32, #tpu.memory_space<vmem>>) attributes {dimension_semantics = [#tpu.dimension_semantics<parallel>], iteration_bounds = array<i64: 2>, scalar_prefetch = 1 : i64, scratch_operands = 0 : i64, tpu.core_type = #tpu.core_type<tc>, window_params = [{transform_indices = @transform_0, window_bounds = array<i64: 8, 128>}, {transform_indices = @transform_1, window_bounds = array<i64: 1, 32, 8>}, {transform_indices = @transform_2, window_bounds = array<i64: 1, 32, 1>}, {transform_indices = @transform_3, window_bounds = array<i64: 32, 128>}]} {
    %c0 = arith.constant 0 : index
    %c0_0 = arith.constant 0 : index
    %c0_1 = arith.constant 0 : index
    %0 = vector.load %arg3[%c0, %c0_0, %c0_1] : memref<1x32x8xf32, #tpu.memory_space<vmem>>, vector<1x32x8xf32>
    %1 = vector.shape_cast %0 : vector<1x32x8xf32> to vector<32x8xf32>
    %c0_2 = arith.constant 0 : index
    %c0_3 = arith.constant 0 : index
    %2 = vector.load %arg2[%c0_2, %c0_3] : memref<8x128xf32, #tpu.memory_space<vmem>>, vector<8x128xf32>
    %cst = arith.constant dense<0.000000e+00> : vector<32x128xf32>
    %3 = tpu.matmul %1, %2, %cst {dimension_numbers = #tpu.dot_dimension_numbers<[1], [0], [0], [1], [0, 0, 1, 1], [], []>, precision = #tpu.contract_precision<fp32>} : vector<32x8xf32>, vector<8x128xf32>, vector<32x128xf32> -> vector<32x128xf32>
    %c0_4 = arith.constant 0 : index
    %c0_5 = arith.constant 0 : index
    %c0_6 = arith.constant 0 : index
    %4 = vector.load %arg4[%c0_4, %c0_5, %c0_6] : memref<1x32x1xf32, #tpu.memory_space<vmem>>, vector<1x32x1xf32>
    %5 = vector.shape_cast %4 : vector<1x32x1xf32> to vector<32x1xf32>
    %6 = vector.broadcast %5 : vector<32x1xf32> to vector<32x128xf32>
    %7 = arith.addf %3, %6 : vector<32x128xf32>
    %c0_7 = arith.constant 0 : index
    %c0_8 = arith.constant 0 : index
    %8 = vector.load %arg5[%c0_7, %c0_8] : memref<32x128xf32, #tpu.memory_space<vmem>>, vector<32x128xf32>
    tpu.vector_store %arg5[%c0_7, %c0_8], %7 {strides = array<i32>} : memref<32x128xf32, #tpu.memory_space<vmem>>, vector<32x128xf32>,
    return
  }
  func.func @transform_0(%arg0: i32, %arg1: memref<2xi32, #tpu.memory_space<smem>>) -> (i32, i32) {
    %c0_i32 = arith.constant 0 : i32
    %c0_i32_0 = arith.constant 0 : i32
    return %c0_i32, %arg0 : i32, i32
  }
  func.func @transform_1(%arg0: i32, %arg1: memref<2xi32, #tpu.memory_space<smem>>) -> (i32, i32, i32) {
    %0 = arith.index_cast %arg0 : i32 to index
    %1 = memref.load %arg1[%0] : memref<2xi32, #tpu.memory_space<smem>>
    %c0_i32 = arith.constant 0 : i32
    %c0_i32_0 = arith.constant 0 : i32
    %c0_i32_1 = arith.constant 0 : i32
    return %1, %c0_i32, %c0_i32_0 : i32, i32, i32
  }
  func.func @transform_2(%arg0: i32, %arg1: memref<2xi32, #tpu.memory_space<smem>>) -> (i32, i32, i32) {
    %0 = arith.index_cast %arg0 : i32 to index
    %1 = memref.load %arg1[%0] : memref<2xi32, #tpu.memory_space<smem>>
    %c0_i32 = arith.constant 0 : i32
    %c0_i32_0 = arith.constant 0 : i32
    %c0_i32_1 = arith.constant 0 : i32
    return %1, %c0_i32, %c0_i32_0 : i32, i32, i32
  }
  func.func @transform_3(%arg0: i32, %arg1: memref<2xi32, #tpu.memory_space<smem>>) -> (i32, i32) {
    %c0_i32 = arith.constant 0 : i32
    %c0_i32_0 = arith.constant 0 : i32
    return %c0_i32, %arg0 : i32, i32
  }
}

</mosaic_0001>

<llo_original>
// kernel: tpu_custom_call.1
$region0: #{tpu_custom_call.1}
  #allocation0 [shape = 'u32[]', space=smem, size = 0x4, offset = 0x4, fixed_abs, tag = 'smem constant byte address 0x4 - core index']
  #allocation1 [shape = 'u32[144,128]{1,0:T(1,128)}', space=vmem, size = 0x12000, scoped, tag = 'internal scratch']
  #allocation2 [shape = 's32[1]{0}', space=sflag, size = 0x4, scoped, tag = 'scoped memory for tpu_custom_call.1']
  #allocation3 [shape = 'u8[512]{0}', space=smem, size = 0x200, scoped, tag = 'prefetched SMEM operand 0']
  %s0 = inlined_call_operand.vmem [shape: s32[2], index: 0, kind: input, shape index: {}]
  %s1 = inlined_call_operand.vmem [shape: f32[8,256], index: 1, kind: input, shape index: {}]
  %s2 = inlined_call_operand.vmem [shape: f32[2,32,8], index: 2, kind: input, shape index: {}]
  %s3 = inlined_call_operand.vmem [shape: f32[2,32,1], index: 3, kind: input, shape index: {}]
  %s4 = inlined_call_operand.hbm [shape: f32[32,256], index: 4, kind: output, shape index: {}]
  %s5 = sld [smem:[#allocation0]]
  $region45: #{tpu_custom_call.1} parent=0
    _
  %s7 = ssub.s32 1, %s5
  %s8 = scalar_select 0, %s7, %s5
  %s9 = sshll.u32 %s0, 4
  %s10 = int_to_ptr.vmem [resolvable:$true] %s9
  %12 = dma.vmem_to_smem %s10, 16, [#allocation3], [#allocation2]
  %13 = dma.done [#allocation2], 16
  %14 = sfence
  $region1: #{tpu_custom_call.1} parent=0
    #allocation4 [shape = 'u8[32768]{0}', space=vmem, size = 0x8000, scoped, tag = 'output window, operand 0']
    #allocation5 [shape = 's32[2]{0}', space=sflag, size = 0x8, scoped, tag = 'scoped memory for tpu_custom_call.1']
    %15 = vsyncpa [#allocation5], 0
    %s16 = scalar_lea.sflag [#allocation5], 1
    %17 = vsyncpa %s16, 0
    loop: start=0, step=1, limit=4
    $region2: #{tpu_custom_call.1} parent=1 // loop_pre_header
      _
    $region3: #{tpu_custom_call.1} parent=1 // loop_header
      %s19 = sphi 0, %s23
      %p20 = scmp.ge.s32.totalorder %s19, 4
      %s29 = sphi 0, %s31
      %s32 = sphi 0, %s29
      %s33 = sphi 0, %s32
      %s49 = sphi 0, %s33
      %s57 = sphi 0, %s59
      %s60 = sphi 0, %s57
      %s61 = sphi 0, %s60
      %s77 = sphi 0, %s61
      %s85 = sphi 0, %s87
      %s88 = sphi 0, %s85
      %s89 = sphi 0, %s88
      %s105 = sphi 0, %s89
      %s111 = sphi 0, %s113
      %s114 = sphi 0, %s111
      %s115 = sphi 0, %s114
      %s131 = sphi 0, %s115
    $region4: #{tpu_custom_call.1} parent=1 // loop_header_branch
      %22 = sbr.rel (%p20) target = $region8
    $region5: #{tpu_custom_call.1} parent=1 // loop_body
      %s24 = ssub.s32 %s19, 1
      %s25 = ssub.s32 %s19, 2
      %s26 = sadd.s32 %s19, 1
      %s27 = ssub.s32 %s19, %s26
      %p28 = scmp.eq.s32.totalorder %s27, 0
      %s30 = sadd.s32 %s29, 1
      %s31 = scalar_select %p28, %s29, %s30
      %p34 = pneg %p28
      %p35 = scmp.eq.s32.totalorder %s19, 1
      %p36 = por %p34, %p35
      %p37 = scmp.ne.s32.totalorder %s29, %s32
      %p38 = scmp.eq.s32.totalorder %s19, 0
      %p39 = por %p37, %p38
      %p40 = scmp.ne.s32.totalorder %s29, %s32
      %p41 = scmp.eq.s32.totalorder %s24, 1
      %p42 = por %p40, %p41
      %p43 = scmp.ne.s32.totalorder %s32, %s33
      %p44 = scmp.eq.s32.totalorder %s24, 0
      %p45 = por %p43, %p44
      %p46 = scmp.ne.s32.totalorder %s32, %s33
      %p47 = scmp.eq.s32.totalorder %s25, 1
      %p48 = por %p46, %p47
      %p50 = scmp.ne.s32.totalorder %s33, %s49
      %p51 = scmp.eq.s32.totalorder %s25, 0
      %p52 = por %p50, %p51
      %s53 = sld [smem:[#allocation3 + %s19]]
      %s54 = sld [smem:[#allocation3 + %s26]]
      %s55 = ssub.s32 %s53, %s54
      %p56 = scmp.eq.s32.totalorder %s55, 0
      %s58 = sadd.s32 %s57, 1
      %s59 = scalar_select %p56, %s57, %s58
      %p62 = pneg %p56
      %p63 = scmp.eq.s32.totalorder %s19, 1
      %p64 = por %p62, %p63
      %p65 = scmp.ne.s32.totalorder %s57, %s60
      %p66 = scmp.eq.s32.totalorder %s19, 0
      %p67 = por %p65, %p66
      %p68 = scmp.ne.s32.totalorder %s57, %s60
      %p69 = scmp.eq.s32.totalorder %s24, 1
      %p70 = por %p68, %p69
      %p71 = scmp.ne.s32.totalorder %s60, %s61
      %p72 = scmp.eq.s32.totalorder %s24, 0
      %p73 = por %p71, %p72
      %p74 = scmp.ne.s32.totalorder %s60, %s61
      %p75 = scmp.eq.s32.totalorder %s25, 1
      %p76 = por %p74, %p75
      %p78 = scmp.ne.s32.totalorder %s61, %s77
      %p79 = scmp.eq.s32.totalorder %s25, 0
      %p80 = por %p78, %p79
      %s81 = sld [smem:[#allocation3 + %s19]]
      %s82 = sld [smem:[#allocation3 + %s26]]
      %s83 = ssub.s32 %s81, %s82
      %p84 = scmp.eq.s32.totalorder %s83, 0
      %s86 = sadd.s32 %s85, 1
      %s87 = scalar_select %p84, %s85, %s86
      %p90 = pneg %p84
      %p91 = scmp.eq.s32.totalorder %s19, 1
      %p92 = por %p90, %p91
      %p93 = scmp.ne.s32.totalorder %s85, %s88
      %p94 = scmp.eq.s32.totalorder %s19, 0
      %p95 = por %p93, %p94
      %p96 = scmp.ne.s32.totalorder %s85, %s88
      %p97 = scmp.eq.s32.totalorder %s24, 1
      %p98 = por %p96, %p97
      %p99 = scmp.ne.s32.totalorder %s88, %s89
      %p100 = scmp.eq.s32.totalorder %s24, 0
      %p101 = por %p99, %p100
      %p102 = scmp.ne.s32.totalorder %s88, %s89
      %p103 = scmp.eq.s32.totalorder %s25, 1
      %p104 = por %p102, %p103
      %p106 = scmp.ne.s32.totalorder %s89, %s105
      %p107 = scmp.eq.s32.totalorder %s25, 0
      %p108 = por %p106, %p107
      %s109 = ssub.s32 %s19, %s26
      %p110 = scmp.eq.s32.totalorder %s109, 0
      %s112 = sadd.s32 %s111, 1
      %s113 = scalar_select %p110, %s111, %s112
      %p116 = pneg %p110
      %p117 = scmp.eq.s32.totalorder %s19, 1
      %p118 = por %p116, %p117
      %p119 = scmp.ne.s32.totalorder %s111, %s114
      %p120 = scmp.eq.s32.totalorder %s19, 0
      %p121 = por %p119, %p120
      %p122 = scmp.ne.s32.totalorder %s111, %s114
      %p123 = scmp.eq.s32.totalorder %s24, 1
      %p124 = por %p122, %p123
      %p125 = scmp.ne.s32.totalorder %s114, %s115
      %p126 = scmp.eq.s32.totalorder %s24, 0
      %p127 = por %p125, %p126
      %p128 = scmp.ne.s32.totalorder %s114, %s115
      %p129 = scmp.eq.s32.totalorder %s25, 1
      %p130 = por %p128, %p129
      %p132 = scmp.ne.s32.totalorder %s115, %s131
      %p133 = scmp.eq.s32.totalorder %s25, 0
      %p134 = por %p132, %p133
      %p135 = scmp.le.s32.totalorder 1, %s19
      %p136 = scmp.lt.s32.totalorder %s19, 3
      %p137 = pnand %p135, %p136
      %p138 = pneg %p137
      // Predicated region
      $region9: #{tpu_custom_call.1} parent=5 // pred_check
        _
      $region10: #{tpu_custom_call.1} parent=5 // pred_check_branch
        %140 = sbr.rel (%p137) target = $region12
      $region11: #{tpu_custom_call.1} parent=5 // pred_region
        %s141 = ssub.s32 %s19, 1
      $region12: #{tpu_custom_call.1} parent=5 // pred_fallthru
        _
      %p142 = scmp.lt.s32.totalorder %s19, 2
      // Predicated region
      $region13: #{tpu_custom_call.1} parent=5 // pred_check
        %p143 = pneg %p142
      $region14: #{tpu_custom_call.1} parent=5 // pred_check_branch
        %145 = sbr.rel (%p143) target = $region16
      $region15: #{tpu_custom_call.1} parent=5 // pred_region
        // Predicated region
        $region17: #{tpu_custom_call.1} parent=15 // pred_check
          %p146 = pneg %p39
        $region18: #{tpu_custom_call.1} parent=15 // pred_check_branch
          %148 = sbr.rel (%p146) target = $region20
        $region19: #{tpu_custom_call.1} parent=15 // pred_region
          %p149 = scmp.lt.s32.totalorder %s19, 1
          %s150 = scalar_select %p149, %s19, 1
          %s151 = smul.addr %s150, 8
          %s152 = scalar_lea.vmem %s1, %s151
        $region20: #{tpu_custom_call.1} parent=15 // pred_fallthru
          _
        // Predicated region
        $region21: #{tpu_custom_call.1} parent=15 // pred_check
          %p153 = pneg %p67
        $region22: #{tpu_custom_call.1} parent=15 // pred_check_branch
          %155 = sbr.rel (%p153) target = $region24
        $region23: #{tpu_custom_call.1} parent=15 // pred_region
          %s156 = sld [smem:[#allocation3 + %s19]]
          %p157 = scmp.lt.s32.totalorder %s156, 1
          %s158 = scalar_select %p157, %s156, 1
          %s159 = smul.addr %s158, 4
          %s160 = smul.addr %s159, 8
          %s161 = scalar_lea.vmem %s2, %s160
          %s162 = sld [smem:[#allocation3 + %s19]]
        $region24: #{tpu_custom_call.1} parent=15 // pred_fallthru
          _
        // Predicated region
        $region25: #{tpu_custom_call.1} parent=15 // pred_check
          %p163 = pneg %p95
        $region26: #{tpu_custom_call.1} parent=15 // pred_check_branch
          %165 = sbr.rel (%p163) target = $region28
        $region27: #{tpu_custom_call.1} parent=15 // pred_region
          %s166 = sld [smem:[#allocation3 + %s19]]
          %p167 = scmp.lt.s32.totalorder %s166, 1
          %s168 = scalar_select %p167, %s166, 1
          %s169 = smul.addr %s168, 4
          %s170 = smul.addr %s169, 8
          %s171 = scalar_lea.vmem %s3, %s170
          %s172 = sld [smem:[#allocation3 + %s19]]
        $region28: #{tpu_custom_call.1} parent=15 // pred_fallthru
          _
      $region16: #{tpu_custom_call.1} parent=5 // pred_fallthru
        _
      %p173 = scmp.le.s32.totalorder 1, %s19
      %p174 = scmp.lt.s32.totalorder %s19, 3
      %p175 = pnand %p173, %p174
      %p176 = pneg %p175
      // Predicated region
      $region29: #{tpu_custom_call.1} parent=5 // pred_check
        _
      $region30: #{tpu_custom_call.1} parent=5 // pred_check_branch
        %178 = sbr.rel (%p175) target = $region32
      $region31: #{tpu_custom_call.1} parent=5 // pred_region
        %s179 = ssub.s32 %s19, 1
        %p180 = scmp.lt.s32.totalorder %s24, 1
        %s181 = scalar_select %p180, %s24, 1
        %s182 = smul.addr %s181, 8
        %s183 = scalar_lea.vmem %s1, %s182
        %p184 = pneg %p45
        %p185 = pneg %p42
        %s186 = sld [smem:[#allocation3 + %s24]]
        %p187 = scmp.lt.s32.totalorder %s186, 1
        %s188 = scalar_select %p187, %s186, 1
        %s189 = smul.addr %s188, 4
        %s190 = smul.addr %s189, 8
        %s191 = scalar_lea.vmem %s2, %s190
        %p192 = pneg %p73
        %p193 = pneg %p70
        %s194 = sld [smem:[#allocation3 + %s24]]
        %p195 = scmp.lt.s32.totalorder %s194, 1
        %s196 = scalar_select %p195, %s194, 1
        %s197 = smul.addr %s196, 4
        %s198 = smul.addr %s197, 8
        %s199 = scalar_lea.vmem %s3, %s198
        %p200 = pneg %p101
        %p201 = pneg %p98
        %p202 = pneg %p127
        %p203 = pneg %p124
        %s204 = sand.u32 %s114, 1
        %s205 = scalar_lea.sflag [#allocation5], %s204
        %s206 = sand.u32 %s114, 1
        %s207 = smul.addr %s206, 32
        %s208 = scalar_lea.vmem [#allocation4], %s207
        %p209 = scmp.lt.s32.totalorder %s24, 1
        %s210 = scalar_select %p209, %s24, 1
        %s211 = smul.addr %s210, 8
        %s212 = scalar_lea.vmem %s1, %s211
        %s213 = sld [smem:[#allocation3 + %s24]]
        %p214 = scmp.lt.s32.totalorder %s213, 1
        %s215 = scalar_select %p214, %s213, 1
        %s216 = smul.addr %s215, 4
        %s217 = smul.addr %s216, 8
        %s218 = scalar_lea.vmem %s2, %s217
        %s219 = sld [smem:[#allocation3 + %s24]]
        %s220 = sld [smem:[#allocation3 + %s24]]
        %p221 = scmp.lt.s32.totalorder %s220, 1
        %s222 = scalar_select %p221, %s220, 1
        %s223 = smul.addr %s222, 4
        %s224 = smul.addr %s223, 8
        %s225 = scalar_lea.vmem %s3, %s224
        %s226 = sld [smem:[#allocation3 + %s24]]
        %v227 = vld [vmem:[%s218] sm:$0xff]
        %v228 = vld [vmem:[%s218 + $0x8] sm:$0xff]
        %v229 = vld [vmem:[%s218 + $0x10] sm:$0xff]
        %v230 = vld [vmem:[%s218 + $0x18] sm:$0xff]
        %v231 = vld [vmem:[%s212] sm:$0xff]
        %v232 = vld [vmem:[%s225] sm:$0xff]
        %v233 = vld [vmem:[%s225 + $0x8] sm:$0xff]
        %v234 = vld [vmem:[%s225 + $0x10] sm:$0xff]
        %v235 = vld [vmem:[%s225 + $0x18] sm:$0xff]
        %237 = vset.pattern.permute.xlu0 0
        %238 = vperm.xlu0 %237, %v232
        %v239 = vpop.permute.xlu0 %238
        %242 = vset.pattern.permute.xlu0 0
        %243 = vperm.xlu0 %242, %v233
        %v244 = vpop.permute.xlu0 %243
        %247 = vset.pattern.permute.xlu0 0
        %248 = vperm.xlu0 %247, %v234
        %v249 = vpop.permute.xlu0 %248
        %252 = vset.pattern.permute.xlu0 0
        %253 = vperm.xlu0 %252, %v235
        %v254 = vpop.permute.xlu0 %253
        %vm256 = vcmask 64512
        %v258 = vsel %vm256, %v227, 0
        %v261 = vsel %vm256, %v228, 0
        %v264 = vsel %vm256, %v229, 0
        %v267 = vsel %vm256, %v230, 0
        %269 = vmatprep.subr.mxu0 0.0
        %270 = vmatpush1.msra.mxu0 0.0
        %271 = vmatprep.subr.mxu0 0.0
        %272 = vmatpush1.msra.mxu0 0.0
        %273 = vmatprep.subr.mxu0 0.0
        %274 = vmatpush1.msra.mxu0 0.0
        %275 = vmatprep.subr.mxu0 0.0
        %276 = vmatpush1.msra.mxu0 0.0
        %277 = vmatprep.subr.mxu0 0.0
        %278 = vmatpush1.msra.mxu0 0.0
        %279 = vmatprep.subr.mxu0 0.0
        %280 = vmatpush1.msra.mxu0 0.0
        %281 = vmatprep.subr.mxu0 0.0
        %282 = vmatpush1.msra.mxu0 0.0
        %283 = vmatprep.subr.mxu0 0.0
        %284 = vmatpush1.msra.mxu0 0.0
        %285 = vmatprep.subr.mxu0 0.0
        %286 = vmatpush1.msra.mxu0 0.0
        %287 = vmatprep.subr.mxu0 0.0
        %288 = vmatpush1.msra.mxu0 0.0
        %289 = vmatprep.subr.mxu0 0.0
        %290 = vmatpush1.msra.mxu0 0.0
        %291 = vmatprep.subr.mxu0 0.0
        %292 = vmatpush1.msra.mxu0 0.0
        %293 = vmatprep.subr.mxu0 0.0
        %294 = vmatpush1.msra.mxu0 0.0
        %295 = vmatprep.subr.mxu0 0.0
        %296 = vmatpush1.msra.mxu0 0.0
        %297 = vmatprep.subr.mxu0 0.0
        %298 = vmatpush1.msra.mxu0 0.0
        %299 = vmatprep.subr.mxu0 0.0
        %v300 = vand.u32 %v231, 4294901760
        %301 = vmatpush1.msra.mxu0 %v300
        %302 = vmatprep.subr.mxu0 0.0
        %303 = vmatpush2.msra.mxu0 0.0
        %304 = vmatprep.subr.mxu0 0.0
        %305 = vmatpush2.msra.mxu0 0.0
        %306 = vmatprep.subr.mxu0 0.0
        %307 = vmatpush2.msra.mxu0 0.0
        %308 = vmatprep.subr.mxu0 0.0
        %309 = vmatpush2.msra.mxu0 0.0
        %310 = vmatprep.subr.mxu0 0.0
        %311 = vmatpush2.msra.mxu0 0.0
        %312 = vmatprep.subr.mxu0 0.0
        %313 = vmatpush2.msra.mxu0 0.0
        %314 = vmatprep.subr.mxu0 0.0
        %315 = vmatpush2.msra.mxu0 0.0
        %316 = vmatprep.subr.mxu0 0.0
        %317 = vmatpush2.msra.mxu0 0.0
        %318 = vmatprep.subr.mxu0 0.0
        %319 = vmatpush2.msra.mxu0 0.0
        %320 = vmatprep.subr.mxu0 0.0
        %321 = vmatpush2.msra.mxu0 0.0
        %322 = vmatprep.subr.mxu0 0.0
        %323 = vmatpush2.msra.mxu0 0.0
        %324 = vmatprep.subr.mxu0 0.0
        %325 = vmatpush2.msra.mxu0 0.0
        %326 = vmatprep.subr.mxu0 0.0
        %327 = vmatpush2.msra.mxu0 0.0
        %328 = vmatprep.subr.mxu0 0.0
        %329 = vmatpush2.msra.mxu0 0.0
        %330 = vmatprep.subr.mxu0 0.0
        %331 = vmatpush2.msra.mxu0 0.0
        %332 = vmatprep.subr.mxu0 0.0
        %333 = vmatpush2.msra.mxu0 0.0
        %334 = vmatprep.mubr.f32.mxu0 0.0
        %v335 = vand.u32 %v258, 4294901760
        %v336 = vsub.f32 %v258, %v335
        %v337 = vand.u32 %v336, 4294901760
        %v338 = vsub.f32 %v336, %v337
        %v339 = vand.u32 %v338, 4294901760
        %340 = vmatmul.mubr.f32.gmra.mxu0 %v339
        %v341 = vpop.f32.mrf.mxu0
        %v342 = vadd.f32 %v239, %v341
        %v343 = vpop.f32.mrf.mxu0
        %344 = vmatprep.mubr.f32.mxu0 0.0
        %v345 = vand.u32 %v261, 4294901760
        %v346 = vsub.f32 %v261, %v345
        %v347 = vand.u32 %v346, 4294901760
        %v348 = vsub.f32 %v346, %v347
        %v349 = vand.u32 %v348, 4294901760
        %350 = vmatmul.mubr.f32.gmra.mxu0 %v349
        %v351 = vpop.f32.mrf.mxu0
        %v352 = vadd.f32 %v244, %v351
        %v353 = vpop.f32.mrf.mxu0
        %354 = vmatprep.mubr.f32.mxu0 0.0
        %v355 = vand.u32 %v264, 4294901760
        %v356 = vsub.f32 %v264, %v355
        %v357 = vand.u32 %v356, 4294901760
        %v358 = vsub.f32 %v356, %v357
        %v359 = vand.u32 %v358, 4294901760
        %360 = vmatmul.mubr.f32.gmra.mxu0 %v359
        %v361 = vpop.f32.mrf.mxu0
        %v362 = vadd.f32 %v249, %v361
        %v363 = vpop.f32.mrf.mxu0
        %364 = vmatprep.mubr.f32.mxu0 0.0
        %v365 = vand.u32 %v267, 4294901760
        %v366 = vsub.f32 %v267, %v365
        %v367 = vand.u32 %v366, 4294901760
        %v368 = vsub.f32 %v366, %v367
        %v369 = vand.u32 %v368, 4294901760
        %370 = vmatmul.mubr.f32.gmra.mxu0 %v369
        %v371 = vpop.f32.mrf.mxu0
        %v372 = vadd.f32 %v254, %v371
        %v373 = vpop.f32.mrf.mxu0
        %374 = vdwg.mxu0
        %375 = vmatprep.subr.mxu0 0.0
        %376 = vmatpush1.msra.mxu0 0.0
        %377 = vmatprep.subr.mxu0 0.0
        %378 = vmatpush1.msra.mxu0 0.0
        %379 = vmatprep.subr.mxu0 0.0
        %380 = vmatpush1.msra.mxu0 0.0
        %381 = vmatprep.subr.mxu0 0.0
        %382 = vmatpush1.msra.mxu0 0.0
        %383 = vmatprep.subr.mxu0 0.0
        %384 = vmatpush1.msra.mxu0 0.0
        %385 = vmatprep.subr.mxu0 0.0
        %386 = vmatpush1.msra.mxu0 0.0
        %387 = vmatprep.subr.mxu0 0.0
        %388 = vmatpush1.msra.mxu0 0.0
        %389 = vmatprep.subr.mxu0 0.0
        %390 = vmatpush1.msra.mxu0 0.0
        %391 = vmatprep.subr.mxu0 0.0
        %392 = vmatpush1.msra.mxu0 0.0
        %393 = vmatprep.subr.mxu0 0.0
        %394 = vmatpush1.msra.mxu0 0.0
        %395 = vmatprep.subr.mxu0 0.0
        %396 = vmatpush1.msra.mxu0 0.0
        %397 = vmatprep.subr.mxu0 0.0
        %398 = vmatpush1.msra.mxu0 0.0
        %399 = vmatprep.subr.mxu0 0.0
        %400 = vmatpush1.msra.mxu0 0.0
        %401 = vmatprep.subr.mxu0 0.0
        %402 = vmatpush1.msra.mxu0 0.0
        %403 = vmatprep.subr.mxu0 0.0
        %404 = vmatpush1.msra.mxu0 0.0
        %405 = vmatprep.subr.mxu0 0.0
        %v406 = vand.u32 %v231, 4294901760
        %v407 = vsub.f32 %v231, %v406
        %v408 = vand.u32 %v407, 4294901760
        %v409 = vsub.f32 %v407, %v408
        %v410 = vand.u32 %v409, 4294901760
        %411 = vmatpush1.msra.mxu0 %v410
        %412 = vmatprep.subr.mxu0 0.0
        %413 = vmatpush2.msra.mxu0 0.0
        %414 = vmatprep.subr.mxu0 0.0
        %415 = vmatpush2.msra.mxu0 0.0
        %416 = vmatprep.subr.mxu0 0.0
        %417 = vmatpush2.msra.mxu0 0.0
        %418 = vmatprep.subr.mxu0 0.0
        %419 = vmatpush2.msra.mxu0 0.0
        %420 = vmatprep.subr.mxu0 0.0
        %421 = vmatpush2.msra.mxu0 0.0
        %422 = vmatprep.subr.mxu0 0.0
        %423 = vmatpush2.msra.mxu0 0.0
        %424 = vmatprep.subr.mxu0 0.0
        %425 = vmatpush2.msra.mxu0 0.0
        %426 = vmatprep.subr.mxu0 0.0
        %427 = vmatpush2.msra.mxu0 0.0
        %428 = vmatprep.subr.mxu0 0.0
        %429 = vmatpush2.msra.mxu0 0.0
        %430 = vmatprep.subr.mxu0 0.0
        %431 = vmatpush2.msra.mxu0 0.0
        %432 = vmatprep.subr.mxu0 0.0
        %433 = vmatpush2.msra.mxu0 0.0
        %434 = vmatprep.subr.mxu0 0.0
        %435 = vmatpush2.msra.mxu0 0.0
        %436 = vmatprep.subr.mxu0 0.0
        %437 = vmatpush2.msra.mxu0 0.0
        %438 = vmatprep.subr.mxu0 0.0
        %439 = vmatpush2.msra.mxu0 0.0
        %440 = vmatprep.subr.mxu0 0.0
        %441 = vmatpush2.msra.mxu0 0.0
        %442 = vmatprep.subr.mxu0 0.0
        %443 = vmatpush2.msra.mxu0 0.0
        %444 = vmatprep.mubr.f32.mxu0 0.0
        %v445 = vand.u32 %v258, 4294901760
        %446 = vmatmul.mubr.f32.gmra.mxu0 %v445
        %v447 = vpop.f32.mrf.mxu0
        %v448 = vadd.f32 %v342, %v447
        %v449 = vpop.f32.mrf.mxu0
        %450 = vmatprep.mubr.f32.mxu0 0.0
        %v451 = vand.u32 %v261, 4294901760
        %452 = vmatmul.mubr.f32.gmra.mxu0 %v451
        %v453 = vpop.f32.mrf.mxu0
        %v454 = vadd.f32 %v352, %v453
        %v455 = vpop.f32.mrf.mxu0
        %456 = vmatprep.mubr.f32.mxu0 0.0
        %v457 = vand.u32 %v264, 4294901760
        %458 = vmatmul.mubr.f32.gmra.mxu0 %v457
        %v459 = vpop.f32.mrf.mxu0
        %v460 = vadd.f32 %v362, %v459
        %v461 = vpop.f32.mrf.mxu0
        %462 = vmatprep.mubr.f32.mxu0 0.0
        %v463 = vand.u32 %v267, 4294901760
        %464 = vmatmul.mubr.f32.gmra.mxu0 %v463
        %v465 = vpop.f32.mrf.mxu0
        %v466 = vadd.f32 %v372, %v465
        %v467 = vpop.f32.mrf.mxu0
        %468 = vdwg.mxu0
        %469 = vmatprep.subr.mxu0 0.0
        %470 = vmatpush1.msra.mxu0 0.0
        %471 = vmatprep.subr.mxu0 0.0
        %472 = vmatpush1.msra.mxu0 0.0
        %473 = vmatprep.subr.mxu0 0.0
        %474 = vmatpush1.msra.mxu0 0.0
        %475 = vmatprep.subr.mxu0 0.0
        %476 = vmatpush1.msra.mxu0 0.0
        %477 = vmatprep.subr.mxu0 0.0
        %478 = vmatpush1.msra.mxu0 0.0
        %479 = vmatprep.subr.mxu0 0.0
        %480 = vmatpush1.msra.mxu0 0.0
        %481 = vmatprep.subr.mxu0 0.0
        %482 = vmatpush1.msra.mxu0 0.0
        %483 = vmatprep.subr.mxu0 0.0
        %484 = vmatpush1.msra.mxu0 0.0
        %485 = vmatprep.subr.mxu0 0.0
        %486 = vmatpush1.msra.mxu0 0.0
        %487 = vmatprep.subr.mxu0 0.0
        %488 = vmatpush1.msra.mxu0 0.0
        %489 = vmatprep.subr.mxu0 0.0
        %490 = vmatpush1.msra.mxu0 0.0
        %491 = vmatprep.subr.mxu0 0.0
        %492 = vmatpush1.msra.mxu0 0.0
        %493 = vmatprep.subr.mxu0 0.0
        %494 = vmatpush1.msra.mxu0 0.0
        %495 = vmatprep.subr.mxu0 0.0
        %496 = vmatpush1.msra.mxu0 0.0
        %497 = vmatprep.subr.mxu0 0.0
        %498 = vmatpush1.msra.mxu0 0.0
        %499 = vmatprep.subr.mxu0 0.0
        %v500 = vand.u32 %v231, 4294901760
        %v501 = vsub.f32 %v231, %v500
        %502 = vmatpush1.msra.mxu0 %v501
        %503 = vmatprep.subr.mxu0 0.0
        %504 = vmatpush2.msra.mxu0 0.0
        %505 = vmatprep.subr.mxu0 0.0
        %506 = vmatpush2.msra.mxu0 0.0
        %507 = vmatprep.subr.mxu0 0.0
        %508 = vmatpush2.msra.mxu0 0.0
        %509 = vmatprep.subr.mxu0 0.0
        %510 = vmatpush2.msra.mxu0 0.0
        %511 = vmatprep.subr.mxu0 0.0
        %512 = vmatpush2.msra.mxu0 0.0
        %513 = vmatprep.subr.mxu0 0.0
        %514 = vmatpush2.msra.mxu0 0.0
        %515 = vmatprep.subr.mxu0 0.0
        %516 = vmatpush2.msra.mxu0 0.0
        %517 = vmatprep.subr.mxu0 0.0
        %518 = vmatpush2.msra.mxu0 0.0
        %519 = vmatprep.subr.mxu0 0.0
        %520 = vmatpush2.msra.mxu0 0.0
        %521 = vmatprep.subr.mxu0 0.0
        %522 = vmatpush2.msra.mxu0 0.0
        %523 = vmatprep.subr.mxu0 0.0
        %524 = vmatpush2.msra.mxu0 0.0
        %525 = vmatprep.subr.mxu0 0.0
        %526 = vmatpush2.msra.mxu0 0.0
        %527 = vmatprep.subr.mxu0 0.0
        %528 = vmatpush2.msra.mxu0 0.0
        %529 = vmatprep.subr.mxu0 0.0
        %530 = vmatpush2.msra.mxu0 0.0
        %531 = vmatprep.subr.mxu0 0.0
        %532 = vmatpush2.msra.mxu0 0.0
        %533 = vmatprep.subr.mxu0 0.0
        %534 = vmatpush2.msra.mxu0 0.0
        %535 = vmatprep.mubr.f32.mxu0 0.0
        %v536 = vand.u32 %v258, 4294901760
        %v537 = vsub.f32 %v258, %v536
        %538 = vmatmul.mubr.f32.gmra.mxu0 %v537
        %v539 = vpop.f32.mrf.mxu0
        %v540 = vadd.f32 %v448, %v539
        %v541 = vpop.f32.mrf.mxu0
        %542 = vmatprep.mubr.f32.mxu0 0.0
        %v543 = vand.u32 %v261, 4294901760
        %v544 = vsub.f32 %v261, %v543
        %545 = vmatmul.mubr.f32.gmra.mxu0 %v544
        %v546 = vpop.f32.mrf.mxu0
        %v547 = vadd.f32 %v454, %v546
        %v548 = vpop.f32.mrf.mxu0
        %549 = vmatprep.mubr.f32.mxu0 0.0
        %v550 = vand.u32 %v264, 4294901760
        %v551 = vsub.f32 %v264, %v550
        %552 = vmatmul.mubr.f32.gmra.mxu0 %v551
        %v553 = vpop.f32.mrf.mxu0
        %v554 = vadd.f32 %v460, %v553
        %v555 = vpop.f32.mrf.mxu0
        %556 = vmatprep.mubr.f32.mxu0 0.0
        %v557 = vand.u32 %v267, 4294901760
        %v558 = vsub.f32 %v267, %v557
        %559 = vmatmul.mubr.f32.gmra.mxu0 %v558
        %v560 = vpop.f32.mrf.mxu0
        %v561 = vadd.f32 %v466, %v560
        %v562 = vpop.f32.mrf.mxu0
        %563 = vdwg.mxu0
        %564 = vmatprep.subr.mxu0 0.0
        %565 = vmatpush1.msra.mxu0 0.0
        %566 = vmatprep.subr.mxu0 0.0
        %567 = vmatpush1.msra.mxu0 0.0
        %568 = vmatprep.subr.mxu0 0.0
        %569 = vmatpush1.msra.mxu0 0.0
        %570 = vmatprep.subr.mxu0 0.0
        %571 = vmatpush1.msra.mxu0 0.0
        %572 = vmatprep.subr.mxu0 0.0
        %573 = vmatpush1.msra.mxu0 0.0
        %574 = vmatprep.subr.mxu0 0.0
        %575 = vmatpush1.msra.mxu0 0.0
        %576 = vmatprep.subr.mxu0 0.0
        %577 = vmatpush1.msra.mxu0 0.0
        %578 = vmatprep.subr.mxu0 0.0
        %579 = vmatpush1.msra.mxu0 0.0
        %580 = vmatprep.subr.mxu0 0.0
        %581 = vmatpush1.msra.mxu0 0.0
        %582 = vmatprep.subr.mxu0 0.0
        %583 = vmatpush1.msra.mxu0 0.0
        %584 = vmatprep.subr.mxu0 0.0
        %585 = vmatpush1.msra.mxu0 0.0
        %586 = vmatprep.subr.mxu0 0.0
        %587 = vmatpush1.msra.mxu0 0.0
        %588 = vmatprep.subr.mxu0 0.0
        %589 = vmatpush1.msra.mxu0 0.0
        %590 = vmatprep.subr.mxu0 0.0
        %591 = vmatpush1.msra.mxu0 0.0
        %592 = vmatprep.subr.mxu0 0.0
        %593 = vmatpush1.msra.mxu0 0.0
        %594 = vmatprep.subr.mxu0 0.0
        %v595 = vand.u32 %v231, 4294901760
        %596 = vmatpush1.msra.mxu0 %v595
        %597 = vmatprep.subr.mxu0 0.0
        %598 = vmatpush2.msra.mxu0 0.0
        %599 = vmatprep.subr.mxu0 0.0
        %600 = vmatpush2.msra.mxu0 0.0
        %601 = vmatprep.subr.mxu0 0.0
        %602 = vmatpush2.msra.mxu0 0.0
        %603 = vmatprep.subr.mxu0 0.0
        %604 = vmatpush2.msra.mxu0 0.0
        %605 = vmatprep.subr.mxu0 0.0
        %606 = vmatpush2.msra.mxu0 0.0
        %607 = vmatprep.subr.mxu0 0.0
        %608 = vmatpush2.msra.mxu0 0.0
        %609 = vmatprep.subr.mxu0 0.0
        %610 = vmatpush2.msra.mxu0 0.0
        %611 = vmatprep.subr.mxu0 0.0
        %612 = vmatpush2.msra.mxu0 0.0
        %613 = vmatprep.subr.mxu0 0.0
        %614 = vmatpush2.msra.mxu0 0.0
        %615 = vmatprep.subr.mxu0 0.0
        %616 = vmatpush2.msra.mxu0 0.0
        %617 = vmatprep.subr.mxu0 0.0
        %618 = vmatpush2.msra.mxu0 0.0
        %619 = vmatprep.subr.mxu0 0.0
        %620 = vmatpush2.msra.mxu0 0.0
        %621 = vmatprep.subr.mxu0 0.0
        %622 = vmatpush2.msra.mxu0 0.0
        %623 = vmatprep.subr.mxu0 0.0
        %624 = vmatpush2.msra.mxu0 0.0
        %625 = vmatprep.subr.mxu0 0.0
        %626 = vmatpush2.msra.mxu0 0.0
        %627 = vmatprep.subr.mxu0 0.0
        %628 = vmatpush2.msra.mxu0 0.0
        %629 = vmatprep.mubr.f32.mxu0 0.0
        %v630 = vand.u32 %v258, 4294901760
        %v631 = vsub.f32 %v258, %v630
        %v632 = vand.u32 %v631, 4294901760
        %633 = vmatmul.mubr.f32.gmra.mxu0 %v632
        %v634 = vpop.f32.mrf.mxu0
        %v635 = vadd.f32 %v540, %v634
        %v636 = vpop.f32.mrf.mxu0
        %637 = vmatprep.mubr.f32.mxu0 0.0
        %v638 = vand.u32 %v261, 4294901760
        %v639 = vsub.f32 %v261, %v638
        %v640 = vand.u32 %v639, 4294901760
        %641 = vmatmul.mubr.f32.gmra.mxu0 %v640
        %v642 = vpop.f32.mrf.mxu0
        %v643 = vadd.f32 %v547, %v642
        %v644 = vpop.f32.mrf.mxu0
        %645 = vmatprep.mubr.f32.mxu0 0.0
        %v646 = vand.u32 %v264, 4294901760
        %v647 = vsub.f32 %v264, %v646
        %v648 = vand.u32 %v647, 4294901760
        %649 = vmatmul.mubr.f32.gmra.mxu0 %v648
        %v650 = vpop.f32.mrf.mxu0
        %v651 = vadd.f32 %v554, %v650
        %v652 = vpop.f32.mrf.mxu0
        %653 = vmatprep.mubr.f32.mxu0 0.0
        %v654 = vand.u32 %v267, 4294901760
        %v655 = vsub.f32 %v267, %v654
        %v656 = vand.u32 %v655, 4294901760
        %657 = vmatmul.mubr.f32.gmra.mxu0 %v656
        %v658 = vpop.f32.mrf.mxu0
        %v659 = vadd.f32 %v561, %v658
        %v660 = vpop.f32.mrf.mxu0
        %661 = vdwg.mxu0
        %662 = vmatprep.subr.mxu0 0.0
        %663 = vmatpush1.msra.mxu0 0.0
        %664 = vmatprep.subr.mxu0 0.0
        %665 = vmatpush1.msra.mxu0 0.0
        %666 = vmatprep.subr.mxu0 0.0
        %667 = vmatpush1.msra.mxu0 0.0
        %668 = vmatprep.subr.mxu0 0.0
        %669 = vmatpush1.msra.mxu0 0.0
        %670 = vmatprep.subr.mxu0 0.0
        %671 = vmatpush1.msra.mxu0 0.0
        %672 = vmatprep.subr.mxu0 0.0
        %673 = vmatpush1.msra.mxu0 0.0
        %674 = vmatprep.subr.mxu0 0.0
        %675 = vmatpush1.msra.mxu0 0.0
        %676 = vmatprep.subr.mxu0 0.0
        %677 = vmatpush1.msra.mxu0 0.0
        %678 = vmatprep.subr.mxu0 0.0
        %679 = vmatpush1.msra.mxu0 0.0
        %680 = vmatprep.subr.mxu0 0.0
        %681 = vmatpush1.msra.mxu0 0.0
        %682 = vmatprep.subr.mxu0 0.0
        %683 = vmatpush1.msra.mxu0 0.0
        %684 = vmatprep.subr.mxu0 0.0
        %685 = vmatpush1.msra.mxu0 0.0
        %686 = vmatprep.subr.mxu0 0.0
        %687 = vmatpush1.msra.mxu0 0.0
        %688 = vmatprep.subr.mxu0 0.0
        %689 = vmatpush1.msra.mxu0 0.0
        %690 = vmatprep.subr.mxu0 0.0
        %691 = vmatpush1.msra.mxu0 0.0
        %692 = vmatprep.subr.mxu0 0.0
        %v693 = vand.u32 %v231, 4294901760
        %v694 = vsub.f32 %v231, %v693
        %v695 = vand.u32 %v694, 4294901760
        %696 = vmatpush1.msra.mxu0 %v695
        %697 = vmatprep.subr.mxu0 0.0
        %698 = vmatpush2.msra.mxu0 0.0
        %699 = vmatprep.subr.mxu0 0.0
        %700 = vmatpush2.msra.mxu0 0.0
        %701 = vmatprep.subr.mxu0 0.0
        %702 = vmatpush2.msra.mxu0 0.0
        %703 = vmatprep.subr.mxu0 0.0
        %704 = vmatpush2.msra.mxu0 0.0
        %705 = vmatprep.subr.mxu0 0.0
        %706 = vmatpush2.msra.mxu0 0.0
        %707 = vmatprep.subr.mxu0 0.0
        %708 = vmatpush2.msra.mxu0 0.0
        %709 = vmatprep.subr.mxu0 0.0
        %710 = vmatpush2.msra.mxu0 0.0
        %711 = vmatprep.subr.mxu0 0.0
        %712 = vmatpush2.msra.mxu0 0.0
        %713 = vmatprep.subr.mxu0 0.0
        %714 = vmatpush2.msra.mxu0 0.0
        %715 = vmatprep.subr.mxu0 0.0
        %716 = vmatpush2.msra.mxu0 0.0
        %717 = vmatprep.subr.mxu0 0.0
        %718 = vmatpush2.msra.mxu0 0.0
        %719 = vmatprep.subr.mxu0 0.0
        %720 = vmatpush2.msra.mxu0 0.0
        %721 = vmatprep.subr.mxu0 0.0
        %722 = vmatpush2.msra.mxu0 0.0
        %723 = vmatprep.subr.mxu0 0.0
        %724 = vmatpush2.msra.mxu0 0.0
        %725 = vmatprep.subr.mxu0 0.0
        %726 = vmatpush2.msra.mxu0 0.0
        %727 = vmatprep.subr.mxu0 0.0
        %728 = vmatpush2.msra.mxu0 0.0
        %729 = vmatprep.mubr.f32.mxu0 0.0
        %v730 = vand.u32 %v258, 4294901760
        %731 = vmatmul.mubr.f32.gmra.mxu0 %v730
        %v732 = vpop.f32.mrf.mxu0
        %v733 = vadd.f32 %v635, %v732
        %v734 = vpop.f32.mrf.mxu0
        %735 = vmatprep.mubr.f32.mxu0 0.0
        %v736 = vand.u32 %v261, 4294901760
        %737 = vmatmul.mubr.f32.gmra.mxu0 %v736
        %v738 = vpop.f32.mrf.mxu0
        %v739 = vadd.f32 %v643, %v738
        %v740 = vpop.f32.mrf.mxu0
        %741 = vmatprep.mubr.f32.mxu0 0.0
        %v742 = vand.u32 %v264, 4294901760
        %743 = vmatmul.mubr.f32.gmra.mxu0 %v742
        %v744 = vpop.f32.mrf.mxu0
        %v745 = vadd.f32 %v651, %v744
        %v746 = vpop.f32.mrf.mxu0
        %747 = vmatprep.mubr.f32.mxu0 0.0
        %v748 = vand.u32 %v267, 4294901760
        %749 = vmatmul.mubr.f32.gmra.mxu0 %v748
        %v750 = vpop.f32.mrf.mxu0
        %v751 = vadd.f32 %v659, %v750
        %v752 = vpop.f32.mrf.mxu0
        %753 = vdwg.mxu0
        %754 = vmatprep.subr.mxu0 0.0
        %755 = vmatpush1.msra.mxu0 0.0
        %756 = vmatprep.subr.mxu0 0.0
        %757 = vmatpush1.msra.mxu0 0.0
        %758 = vmatprep.subr.mxu0 0.0
        %759 = vmatpush1.msra.mxu0 0.0
        %760 = vmatprep.subr.mxu0 0.0
        %761 = vmatpush1.msra.mxu0 0.0
        %762 = vmatprep.subr.mxu0 0.0
        %763 = vmatpush1.msra.mxu0 0.0
        %764 = vmatprep.subr.mxu0 0.0
        %765 = vmatpush1.msra.mxu0 0.0
        %766 = vmatprep.subr.mxu0 0.0
        %767 = vmatpush1.msra.mxu0 0.0
        %768 = vmatprep.subr.mxu0 0.0
        %769 = vmatpush1.msra.mxu0 0.0
        %770 = vmatprep.subr.mxu0 0.0
        %771 = vmatpush1.msra.mxu0 0.0
        %772 = vmatprep.subr.mxu0 0.0
        %773 = vmatpush1.msra.mxu0 0.0
        %774 = vmatprep.subr.mxu0 0.0
        %775 = vmatpush1.msra.mxu0 0.0
        %776 = vmatprep.subr.mxu0 0.0
        %777 = vmatpush1.msra.mxu0 0.0
        %778 = vmatprep.subr.mxu0 0.0
        %779 = vmatpush1.msra.mxu0 0.0
        %780 = vmatprep.subr.mxu0 0.0
        %781 = vmatpush1.msra.mxu0 0.0
        %782 = vmatprep.subr.mxu0 0.0
        %783 = vmatpush1.msra.mxu0 0.0
        %784 = vmatprep.subr.mxu0 0.0
        %v785 = vand.u32 %v231, 4294901760
        %786 = vmatpush1.msra.mxu0 %v785
        %787 = vmatprep.subr.mxu0 0.0
        %788 = vmatpush2.msra.mxu0 0.0
        %789 = vmatprep.subr.mxu0 0.0
        %790 = vmatpush2.msra.mxu0 0.0
        %791 = vmatprep.subr.mxu0 0.0
        %792 = vmatpush2.msra.mxu0 0.0
        %793 = vmatprep.subr.mxu0 0.0
        %794 = vmatpush2.msra.mxu0 0.0
        %795 = vmatprep.subr.mxu0 0.0
        %796 = vmatpush2.msra.mxu0 0.0
        %797 = vmatprep.subr.mxu0 0.0
        %798 = vmatpush2.msra.mxu0 0.0
        %799 = vmatprep.subr.mxu0 0.0
        %800 = vmatpush2.msra.mxu0 0.0
        %801 = vmatprep.subr.mxu0 0.0
        %802 = vmatpush2.msra.mxu0 0.0
        %803 = vmatprep.subr.mxu0 0.0
        %804 = vmatpush2.msra.mxu0 0.0
        %805 = vmatprep.subr.mxu0 0.0
        %806 = vmatpush2.msra.mxu0 0.0
        %807 = vmatprep.subr.mxu0 0.0
        %808 = vmatpush2.msra.mxu0 0.0
        %809 = vmatprep.subr.mxu0 0.0
        %810 = vmatpush2.msra.mxu0 0.0
        %811 = vmatprep.subr.mxu0 0.0
        %812 = vmatpush2.msra.mxu0 0.0
        %813 = vmatprep.subr.mxu0 0.0
        %814 = vmatpush2.msra.mxu0 0.0
        %815 = vmatprep.subr.mxu0 0.0
        %816 = vmatpush2.msra.mxu0 0.0
        %817 = vmatprep.subr.mxu0 0.0
        %818 = vmatpush2.msra.mxu0 0.0
        %819 = vmatprep.mubr.f32.mxu0 0.0
        %v820 = vand.u32 %v258, 4294901760
        %821 = vmatmul.mubr.f32.gmra.mxu0 %v820
        %v822 = vpop.f32.mrf.mxu0
        %v823 = vadd.f32 %v733, %v822
        %v824 = vpop.f32.mrf.mxu0
        %825 = vmatprep.mubr.f32.mxu0 0.0
        %v826 = vand.u32 %v261, 4294901760
        %827 = vmatmul.mubr.f32.gmra.mxu0 %v826
        %v828 = vpop.f32.mrf.mxu0
        %v829 = vadd.f32 %v739, %v828
        %v830 = vpop.f32.mrf.mxu0
        %831 = vmatprep.mubr.f32.mxu0 0.0
        %v832 = vand.u32 %v264, 4294901760
        %833 = vmatmul.mubr.f32.gmra.mxu0 %v832
        %v834 = vpop.f32.mrf.mxu0
        %v835 = vadd.f32 %v745, %v834
        %v836 = vpop.f32.mrf.mxu0
        %837 = vmatprep.mubr.f32.mxu0 0.0
        %v838 = vand.u32 %v267, 4294901760
        %839 = vmatmul.mubr.f32.gmra.mxu0 %v838
        %v840 = vpop.f32.mrf.mxu0
        %v841 = vadd.f32 %v751, %v840
        %v842 = vpop.f32.mrf.mxu0
        %843 = vdwg.mxu0
        %844 = vst [vmem:[%s208] sm:$0xff] %v823
        %845 = vst [vmem:[%s208 + $0x8] sm:$0xff] %v829
        %846 = vst [vmem:[%s208 + $0x10] sm:$0xff] %v835
        %847 = vst [vmem:[%s208 + $0x18] sm:$0xff] %v841
        %s848 = sand.u32 %s114, 1
        %s849 = scalar_lea.sflag [#allocation5], %s848
        %s850 = sand.u32 %s114, 1
        %s851 = smul.addr %s850, 32
        %s852 = scalar_lea.vmem [#allocation4], %s851
        // Predicated region
        $region33: #{tpu_custom_call.1} parent=31 // pred_check
          %p853 = pneg %p124
        $region34: #{tpu_custom_call.1} parent=31 // pred_check_branch
          %855 = sbr.rel (%p853) target = $region36
        $region35: #{tpu_custom_call.1} parent=31 // pred_region
          %s857 = ssub.s32 512, 512
          %858 = vsyncadd %s849, %s857
          %s859 = smul.addr %s24, 128
          %s860 = scalar_lea.hbm %s4, %s859
          %s861 = sshll.u32 %s852, 4
          %s862 = int_to_ptr.vmem [resolvable:$true] %s861
          %867 = dma.vmem_to_hbm [thread:$0]  %s862, 512, %s860, %s849, 128, 256, 8
        $region36: #{tpu_custom_call.1} parent=31 // pred_fallthru
          _
      $region32: #{tpu_custom_call.1} parent=5 // pred_fallthru
        _
      %p868 = scmp.le.s32.totalorder 2, %s19
      // Predicated region
      $region37: #{tpu_custom_call.1} parent=5 // pred_check
        %p869 = pneg %p868
      $region38: #{tpu_custom_call.1} parent=5 // pred_check_branch
        %871 = sbr.rel (%p869) target = $region40
      $region39: #{tpu_custom_call.1} parent=5 // pred_region
        %s872 = ssub.s32 %s19, 2
        // Predicated region
        $region41: #{tpu_custom_call.1} parent=39 // pred_check
          %p873 = pneg %p130
        $region42: #{tpu_custom_call.1} parent=39 // pred_check_branch
          %875 = sbr.rel (%p873) target = $region44
        $region43: #{tpu_custom_call.1} parent=39 // pred_region
          %s876 = sand.u32 %s115, 1
          %s877 = scalar_lea.sflag [#allocation5], %s876
          %s878 = sand.u32 %s115, 1
          %s879 = smul.addr %s878, 32
          %s880 = scalar_lea.vmem [#allocation4], %s879
          %881 = dma.done %s877, 512
        $region44: #{tpu_custom_call.1} parent=39 // pred_fallthru
          _
      $region40: #{tpu_custom_call.1} parent=5 // pred_fallthru
        _
    $region6: #{tpu_custom_call.1} parent=1 // loop_footer
      %s23 = sadd.s32 1, %s19
    $region7: #{tpu_custom_call.1} parent=1 // loop_footer_branch
      %18 = sbr.rel target = $region3
    $region8: #{tpu_custom_call.1} parent=1 // loop_exit
      _
    %882 = vsyncpa [#allocation5], 1
    %s883 = scalar_lea.sflag [#allocation5], 1
    %884 = vsyncpa %s883, 1

</llo_original>
